<compile_context>
chip_gen: v5e
topology: v5e:2x2
jax: 0.10.0
libtpu: 0.0.40
codegen_flags: <defaults>
</compile_context>

<pallas_src>
import jax
import jax.numpy as jnp
from jax.experimental import pallas as pl
from jax.experimental.pallas import tpu as pltpu

Z_DIM = 64
IMG_DIM = 7
HIDDEN = (256, 128, 64)

H3_PAD = 128     # pad the 64-wide hidden layer to 128 lanes (exact: zero pad)
OUT_PAD = 128    # pad the 7-wide output to 128 lanes (unmasked stores)


def _leaky_relu(x, slope=0.01):
    return jnp.where(x > 0, x, slope * x)


def generator_kernel(x_ref,
                     w1_ref, b1_ref,
                     w2_ref, b2_ref,
                     w3_ref, b3_ref,
                     w4_ref, b4_ref,
                     o_ref):
    # Fully fused MLP on one (batch_tile, Z_DIM) row-block:
    # 4 MXU matmuls (f32 accumulation) + VPU LeakyReLU + EUP tanh,
    # all elementwise math in f32 (v5e VPU/EUP have no bf16).
    cdt = w1_ref.dtype  # matmul operand dtype (f32 or bf16)

    h = jnp.dot(x_ref[...], w1_ref[...], preferred_element_type=jnp.float32)
    h = _leaky_relu(h + b1_ref[...])

    h = jnp.dot(h.astype(cdt), w2_ref[...], preferred_element_type=jnp.float32)
    h = _leaky_relu(h + b2_ref[...])

    h = jnp.dot(h.astype(cdt), w3_ref[...], preferred_element_type=jnp.float32)
    h = _leaky_relu(h + b3_ref[...])

    h = jnp.dot(h.astype(cdt), w4_ref[...], preferred_element_type=jnp.float32)
    o_ref[...] = jnp.tanh(h + b4_ref[...]).astype(o_ref.dtype)


def prepare_params(params, compute_dtype=jnp.bfloat16):
    """Pad/cast weights ONCE at init (hoisted out of the per-call path).

    Returns a tuple (w1,b1,...,w4,b4) ready for generator_forward.  Zero
    padding of the 64-wide hidden layer and the 7-wide output is numerically
    exact; biases stay f32 so the elementwise path is f32 on every chip.
    """
    w1 = params["w1"].astype(compute_dtype)                                   # (64, 256)
    b1 = params["b1"].astype(jnp.float32)                                     # (1, 256)
    w2 = params["w2"].astype(compute_dtype)                                   # (256, 128)
    b2 = params["b2"].astype(jnp.float32)                                     # (1, 128)
    w3 = jnp.pad(params["w3"],
                 ((0, 0), (0, H3_PAD - HIDDEN[2]))).astype(compute_dtype)     # (128, 128)
    b3 = jnp.pad(params["b3"],
                 ((0, 0), (0, H3_PAD - HIDDEN[2]))).astype(jnp.float32)       # (1, 128)
    w4 = jnp.pad(params["w4"],
                 ((0, H3_PAD - HIDDEN[2]),
                  (0, OUT_PAD - IMG_DIM))).astype(compute_dtype)              # (128, 128)
    b4 = jnp.pad(params["b4"],
                 ((0, 0), (0, OUT_PAD - IMG_DIM))).astype(jnp.float32)        # (1, 128)
    return (w1, b1, w2, b2, w3, b3, w4, b4)


def _choose_tiling(batch, max_batch_tile):
    """Single big tile when the batch fits; otherwise the largest cap-sized
    tile with the batch rounded up to a tile multiple (no tile=8 collapse,
    no forced multi-step split on single-TC chips)."""
    b8 = max(8, -(-batch // 8) * 8)              # round batch up to sublane multiple
    tile = min(b8, max(8, (max_batch_tile // 8) * 8))
    b_pad = -(-b8 // tile) * tile                # round up to a tile multiple
    return tile, b_pad


def generator_forward(x, prepared_params, *, max_batch_tile=2048,
                      return_padded=False):
    """x: (B, Z_DIM) float array.  prepared_params: output of prepare_params.

    The compute dtype is inferred from the prepared weights (bf16 recommended
    on all generations; accumulation and elementwise math stay f32).  With
    return_padded=True the raw lane-dense (B_pad, 128) slab is returned so a
    downstream consumer can avoid the padded-array re-read of the slice.
    """
    w1, b1, w2, b2, w3, b3, w4, b4 = prepared_params
    compute_dtype = w1.dtype

    B = x.shape[0]
    tile, B_pad = _choose_tiling(B, max_batch_tile)
    grid = (B_pad // tile,)

    # Batch padding only (no feature padding: K = 64 fed to the MXU directly).
    x_p = x
    if B_pad != B:
        x_p = jnp.pad(x_p, ((0, B_pad - B), (0, 0)))
    if x_p.dtype != compute_dtype:
        x_p = x_p.astype(compute_dtype)

    # Output dtype follows the compute dtype (tanh output is in [-1, 1]):
    # bf16 on the bf16 path halves output HBM traffic.
    out_dtype = compute_dtype

    def whole(arr):
        # Weights/biases are tiny (~330 KB total): keep whole arrays resident.
        return pl.BlockSpec(arr.shape, lambda i: (0,) * arr.ndim)

    out = pl.pallas_call(
        generator_kernel,
        out_shape=jax.ShapeDtypeStruct((B_pad, OUT_PAD), out_dtype),
        grid_spec=pltpu.PrefetchScalarGridSpec(
            num_scalar_prefetch=0,
            grid=grid,
            in_specs=[
                # (tile, 64): last dim equals the full array dim -> legal.
                pl.BlockSpec((tile, Z_DIM), lambda i: (i, 0)),
                whole(w1), whole(b1),
                whole(w2), whole(b2),
                whole(w3), whole(b3),
                whole(w4), whole(b4),
            ],
            out_specs=pl.BlockSpec((tile, OUT_PAD), lambda i: (i, 0)),
        ),
        compiler_params=pltpu.CompilerParams(
            dimension_semantics=("parallel",),
        ),
    )(x_p, w1, b1, w2, b2, w3, b3, w4, b4)

    if return_padded:
        return out                      # (B_pad, 128) lane-dense slab
    # Layout plumbing only: strip the batch / lane padding.
    return out[:B, :IMG_DIM]


def init_params(key):
    """Deterministic init mirroring nn.Linear shapes (stored transposed: (in, out))."""
    dims = (Z_DIM,) + HIDDEN + (IMG_DIM,)   # 64 -> 256 -> 128 -> 64 -> 7
    params = {}
    for idx, (fan_in, fan_out) in enumerate(zip(dims[:-1], dims[1:]), start=1):
        key, kw, kb = jax.random.split(key, 3)
        bound = 1.0 / jnp.sqrt(fan_in)
        params[f"w{idx}"] = jax.random.uniform(
            kw, (fan_in, fan_out), jnp.float32, -bound, bound)
        params[f"b{idx}"] = jax.random.uniform(
            kb, (1, fan_out), jnp.float32, -bound, bound)
    return params


def reference_forward(x, params):
    h = x
    for idx in range(1, 4):
        h = h @ params[f"w{idx}"] + params[f"b{idx}"]
        h = jnp.where(h > 0, h, 0.01 * h)
    h = h @ params["w4"] + params["b4"]
    return jnp.tanh(h)


if __name__ == "__main__":
    key = jax.random.PRNGKey(0)
    key, kx = jax.random.split(key)

    B = 64  # small batch -> single grid step (tile = 64), no forced split
    x = jax.random.normal(kx, (B, Z_DIM), jnp.float32)
    params = init_params(key)

    # f32 path: exact vs. the reference.
    prepared_f32 = prepare_params(params, compute_dtype=jnp.float32)
    out = jax.block_until_ready(generator_forward(x, prepared_f32))
    ref = reference_forward(x, params)
    assert out.shape == (B, IMG_DIM), out.shape
    assert jnp.allclose(out, ref, atol=1e-5, rtol=1e-5), "mismatch vs f32 reference"

    # Recommended bf16 path (half the x/weight/output HBM bytes on every
    # generation; f32 accumulation and f32 elementwise math).
    prepared_bf16 = prepare_params(params)          # bf16 default
    out_bf16 = jax.block_until_ready(generator_forward(x, prepared_bf16))
    assert out_bf16.shape == (B, IMG_DIM), out_bf16.shape
    assert jnp.allclose(out_bf16.astype(jnp.float32), ref,
                        atol=5e-2, rtol=5e-2), "bf16 path drifted"

    # Padded-slab consumer path (skips the re-read slice).
    out_pad = jax.block_until_ready(
        generator_forward(x, prepared_bf16, return_padded=True))
    assert out_pad.shape[1] == OUT_PAD and out_pad.shape[0] % 8 == 0

    print("KERNEL_OK")
</pallas_src>

<mosaic_0001>
module attributes {stable_mosaic.version = 11 : i64} {
  func.func @generator_kernel(%arg0: i32, %arg1: memref<64x64xf32, #tpu.memory_space<vmem>>, %arg2: memref<64x256xf32, #tpu.memory_space<vmem>>, %arg3: memref<1x256xf32, #tpu.memory_space<vmem>>, %arg4: memref<256x128xf32, #tpu.memory_space<vmem>>, %arg5: memref<1x128xf32, #tpu.memory_space<vmem>>, %arg6: memref<128x128xf32, #tpu.memory_space<vmem>>, %arg7: memref<1x128xf32, #tpu.memory_space<vmem>>, %arg8: memref<128x128xf32, #tpu.memory_space<vmem>>, %arg9: memref<1x128xf32, #tpu.memory_space<vmem>>, %arg10: memref<64x128xf32, #tpu.memory_space<vmem>>) attributes {dimension_semantics = [#tpu.dimension_semantics<parallel>], iteration_bounds = array<i64: 1>, scalar_prefetch = 0 : i64, scratch_operands = 0 : i64, tpu.core_type = #tpu.core_type<tc>, window_params = [{transform_indices = @transform_0, window_bounds = array<i64: 64, 64>}, {pipeline_mode = #tpu.pipeline_mode<synchronous>, transform_indices = @transform_1, window_bounds = array<i64: 64, 256>}, {pipeline_mode = #tpu.pipeline_mode<synchronous>, transform_indices = @transform_2, window_bounds = array<i64: 1, 256>}, {pipeline_mode = #tpu.pipeline_mode<synchronous>, transform_indices = @transform_3, window_bounds = array<i64: 256, 128>}, {pipeline_mode = #tpu.pipeline_mode<synchronous>, transform_indices = @transform_4, window_bounds = array<i64: 1, 128>}, {pipeline_mode = #tpu.pipeline_mode<synchronous>, transform_indices = @transform_5, window_bounds = array<i64: 128, 128>}, {pipeline_mode = #tpu.pipeline_mode<synchronous>, transform_indices = @transform_6, window_bounds = array<i64: 1, 128>}, {pipeline_mode = #tpu.pipeline_mode<synchronous>, transform_indices = @transform_7, window_bounds = array<i64: 128, 128>}, {pipeline_mode = #tpu.pipeline_mode<synchronous>, transform_indices = @transform_8, window_bounds = array<i64: 1, 128>}, {transform_indices = @transform_9, window_bounds = array<i64: 64, 128>}]} {
    %c0 = arith.constant 0 : index
    %c0_0 = arith.constant 0 : index
    %0 = vector.load %arg1[%c0, %c0_0] : memref<64x64xf32, #tpu.memory_space<vmem>>, vector<64x64xf32>
    %c0_1 = arith.constant 0 : index
    %c0_2 = arith.constant 0 : index
    %1 = vector.load %arg2[%c0_1, %c0_2] : memref<64x256xf32, #tpu.memory_space<vmem>>, vector<64x256xf32>
    %cst = arith.constant dense<0.000000e+00> : vector<64x256xf32>
    %2 = tpu.matmul %0, %1, %cst {dimension_numbers = #tpu.dot_dimension_numbers<[1], [0], [0], [1], [0, 0, 1, 1], [], []>} : vector<64x64xf32>, vector<64x256xf32>, vector<64x256xf32> -> vector<64x256xf32>
    %c0_3 = arith.constant 0 : index
    %c0_4 = arith.constant 0 : index
    %3 = vector.load %arg3[%c0_3, %c0_4] : memref<1x256xf32, #tpu.memory_space<vmem>>, vector<1x256xf32>
    %4 = vector.broadcast %3 : vector<1x256xf32> to vector<64x256xf32>
    %5 = arith.addf %2, %4 : vector<64x256xf32>
    %cst_5 = arith.constant 0.000000e+00 : f32
    %6 = vector.broadcast %cst_5 : f32 to vector<64x256xf32>
    %7 = arith.cmpf ogt, %5, %6 : vector<64x256xf32>
    %cst_6 = arith.constant 0.00999999977 : f32
    %8 = vector.broadcast %cst_6 : f32 to vector<64x256xf32>
    %9 = arith.mulf %8, %5 : vector<64x256xf32>
    %10 = arith.select %7, %5, %9 : vector<64x256xi1>, vector<64x256xf32>
    %c0_7 = arith.constant 0 : index
    %c0_8 = arith.constant 0 : index
    %11 = vector.load %arg4[%c0_7, %c0_8] : memref<256x128xf32, #tpu.memory_space<vmem>>, vector<256x128xf32>
    %cst_9 = arith.constant dense<0.000000e+00> : vector<64x128xf32>
    %12 = tpu.matmul %10, %11, %cst_9 {dimension_numbers = #tpu.dot_dimension_numbers<[1], [0], [0], [1], [0, 0, 1, 1], [], []>} : vector<64x256xf32>, vector<256x128xf32>, vector<64x128xf32> -> vector<64x128xf32>
    %c0_10 = arith.constant 0 : index
    %c0_11 = arith.constant 0 : index
    %13 = vector.load %arg5[%c0_10, %c0_11] : memref<1x128xf32, #tpu.memory_space<vmem>>, vector<1x128xf32>
    %14 = vector.broadcast %13 : vector<1x128xf32> to vector<64x128xf32>
    %15 = arith.addf %12, %14 : vector<64x128xf32>
    %cst_12 = arith.constant 0.000000e+00 : f32
    %16 = vector.broadcast %cst_12 : f32 to vector<64x128xf32>
    %17 = arith.cmpf ogt, %15, %16 : vector<64x128xf32>
    %cst_13 = arith.constant 0.00999999977 : f32
    %18 = vector.broadcast %cst_13 : f32 to vector<64x128xf32>
    %19 = arith.mulf %18, %15 : vector<64x128xf32>
    %20 = arith.select %17, %15, %19 : vector<64x128xi1>, vector<64x128xf32>
    %c0_14 = arith.constant 0 : index
    %c0_15 = arith.constant 0 : index
    %21 = vector.load %arg6[%c0_14, %c0_15] : memref<128x128xf32, #tpu.memory_space<vmem>>, vector<128x128xf32>
    %cst_16 = arith.constant dense<0.000000e+00> : vector<64x128xf32>
    %22 = tpu.matmul %20, %21, %cst_16 {dimension_numbers = #tpu.dot_dimension_numbers<[1], [0], [0], [1], [0, 0, 1, 1], [], []>} : vector<64x128xf32>, vector<128x128xf32>, vector<64x128xf32> -> vector<64x128xf32>
    %c0_17 = arith.constant 0 : index
    %c0_18 = arith.constant 0 : index
    %23 = vector.load %arg7[%c0_17, %c0_18] : memref<1x128xf32, #tpu.memory_space<vmem>>, vector<1x128xf32>
    %24 = vector.broadcast %23 : vector<1x128xf32> to vector<64x128xf32>
    %25 = arith.addf %22, %24 : vector<64x128xf32>
    %cst_19 = arith.constant 0.000000e+00 : f32
    %26 = vector.broadcast %cst_19 : f32 to vector<64x128xf32>
    %27 = arith.cmpf ogt, %25, %26 : vector<64x128xf32>
    %cst_20 = arith.constant 0.00999999977 : f32
    %28 = vector.broadcast %cst_20 : f32 to vector<64x128xf32>
    %29 = arith.mulf %28, %25 : vector<64x128xf32>
    %30 = arith.select %27, %25, %29 : vector<64x128xi1>, vector<64x128xf32>
    %c0_21 = arith.constant 0 : index
    %c0_22 = arith.constant 0 : index
    %31 = vector.load %arg8[%c0_21, %c0_22] : memref<128x128xf32, #tpu.memory_space<vmem>>, vector<128x128xf32>
    %cst_23 = arith.constant dense<0.000000e+00> : vector<64x128xf32>
    %32 = tpu.matmul %30, %31, %cst_23 {dimension_numbers = #tpu.dot_dimension_numbers<[1], [0], [0], [1], [0, 0, 1, 1], [], []>} : vector<64x128xf32>, vector<128x128xf32>, vector<64x128xf32> -> vector<64x128xf32>
    %c0_24 = arith.constant 0 : index
    %c0_25 = arith.constant 0 : index
    %33 = vector.load %arg9[%c0_24, %c0_25] : memref<1x128xf32, #tpu.memory_space<vmem>>, vector<1x128xf32>
    %34 = vector.broadcast %33 : vector<1x128xf32> to vector<64x128xf32>
    %35 = arith.addf %32, %34 : vector<64x128xf32>
    %36 = math.tanh %35 : vector<64x128xf32>
    %c0_26 = arith.constant 0 : index
    %c0_27 = arith.constant 0 : index
    %37 = vector.load %arg10[%c0_26, %c0_27] : memref<64x128xf32, #tpu.memory_space<vmem>>, vector<64x128xf32>
    tpu.vector_store %arg10[%c0_26, %c0_27], %36 {strides = array<i32>} : memref<64x128xf32, #tpu.memory_space<vmem>>, vector<64x128xf32>,
    return
  }
  func.func @transform_0(%arg0: i32) -> (i32, i32) {
    %c0_i32 = arith.constant 0 : i32
    %c0_i32_0 = arith.constant 0 : i32
    return %arg0, %c0_i32 : i32, i32
  }
  func.func @transform_1(%arg0: i32) -> (i32, i32) {
    %c0_i32 = arith.constant 0 : i32
    %c0_i32_0 = arith.constant 0 : i32
    %c0_i32_1 = arith.constant 0 : i32
    return %c0_i32, %c0_i32_0 : i32, i32
  }
  func.func @transform_2(%arg0: i32) -> (i32, i32) {
    %c0_i32 = arith.constant 0 : i32
    %c0_i32_0 = arith.constant 0 : i32
    %c0_i32_1 = arith.constant 0 : i32
    return %c0_i32, %c0_i32_0 : i32, i32
  }
  func.func @transform_3(%arg0: i32) -> (i32, i32) {
    %c0_i32 = arith.constant 0 : i32
    %c0_i32_0 = arith.constant 0 : i32
    %c0_i32_1 = arith.constant 0 : i32
    return %c0_i32, %c0_i32_0 : i32, i32
  }
  func.func @transform_4(%arg0: i32) -> (i32, i32) {
    %c0_i32 = arith.constant 0 : i32
    %c0_i32_0 = arith.constant 0 : i32
    %c0_i32_1 = arith.constant 0 : i32
    return %c0_i32, %c0_i32_0 : i32, i32
  }
  func.func @transform_5(%arg0: i32) -> (i32, i32) {
    %c0_i32 = arith.constant 0 : i32
    %c0_i32_0 = arith.constant 0 : i32
    %c0_i32_1 = arith.constant 0 : i32
    return %c0_i32, %c0_i32_0 : i32, i32
  }
  func.func @transform_6(%arg0: i32) -> (i32, i32) {
    %c0_i32 = arith.constant 0 : i32
    %c0_i32_0 = arith.constant 0 : i32
    %c0_i32_1 = arith.constant 0 : i32
    return %c0_i32, %c0_i32_0 : i32, i32
  }
  func.func @transform_7(%arg0: i32) -> (i32, i32) {
    %c0_i32 = arith.constant 0 : i32
    %c0_i32_0 = arith.constant 0 : i32
    %c0_i32_1 = arith.constant 0 : i32
    return %c0_i32, %c0_i32_0 : i32, i32
  }
  func.func @transform_8(%arg0: i32) -> (i32, i32) {
    %c0_i32 = arith.constant 0 : i32
    %c0_i32_0 = arith.constant 0 : i32
    %c0_i32_1 = arith.constant 0 : i32
    return %c0_i32, %c0_i32_0 : i32, i32
  }
  func.func @transform_9(%arg0: i32) -> (i32, i32) {
    %c0_i32 = arith.constant 0 : i32
    %c0_i32_0 = arith.constant 0 : i32
    return %arg0, %c0_i32 : i32, i32
  }
}

</mosaic_0001>

<llo_original>
// kernel: tpu_custom_call.1
$region0: #{tpu_custom_call.1}
  #allocation0 [shape = 'u32[]', space=smem, size = 0x4, offset = 0x4, fixed_abs, tag = 'smem constant byte address 0x4 - core index']
  #allocation1 [shape = 'u32[72,128]{1,0:T(1,128)}', space=vmem, size = 0x9000, scoped, tag = 'internal scratch']
  %s0 = inlined_call_operand.hbm [shape: f32[64,64], index: 0, kind: input, shape index: {}]
  %s1 = inlined_call_operand.hbm [shape: f32[64,256], index: 1, kind: input, shape index: {}]
  %s2 = inlined_call_operand.hbm [shape: f32[1,256], index: 2, kind: input, shape index: {}]
  %s3 = inlined_call_operand.hbm [shape: f32[256,128], index: 3, kind: input, shape index: {}]
  %s4 = inlined_call_operand.vmem [shape: f32[1,128], index: 4, kind: input, shape index: {}]
  %s5 = inlined_call_operand.hbm [shape: f32[128,128], index: 5, kind: input, shape index: {}]
  %s6 = inlined_call_operand.vmem [shape: f32[1,128], index: 6, kind: input, shape index: {}]
  %s7 = inlined_call_operand.hbm [shape: f32[128,128], index: 7, kind: input, shape index: {}]
  %s8 = inlined_call_operand.vmem [shape: f32[1,128], index: 8, kind: input, shape index: {}]
  %s9 = inlined_call_operand.hbm [shape: f32[64,128], index: 9, kind: output, shape index: {}]
  %s10 = sld [smem:[#allocation0]]
  $region70: #{tpu_custom_call.1} parent=0
    _
  %s12 = ssub.s32 1, %s10
  %s13 = scalar_select 0, %s12, %s10
  $region1: #{tpu_custom_call.1} parent=0
    #allocation2 [shape = 'u8[32768]{0}', space=vmem, size = 0x8000, scoped, tag = 'input window, operand 0, single buffered']
    #allocation3 [shape = 's32[1]{0}', space=sflag, size = 0x4, scoped, tag = 'scoped memory for tpu_custom_call.1']
    #allocation4 [shape = 's32[1]{0}', space=sflag, size = 0x4, scoped, tag = 'scoped memory for tpu_custom_call.1']
    #allocation5 [shape = 'u8[65536]{0}', space=vmem, size = 0x10000, scoped, tag = 'input window, operand 1, single buffered']
    #allocation6 [shape = 's32[1]{0}', space=sflag, size = 0x4, scoped, tag = 'scoped memory for tpu_custom_call.1']
    #allocation7 [shape = 'u8[1024]{0}', space=vmem, size = 0x400, scoped, tag = 'input window, operand 2, single buffered']
    #allocation8 [shape = 'u8[131072]{0}', space=vmem, size = 0x20000, scoped, tag = 'input window, operand 3, single buffered']
    #allocation9 [shape = 's32[1]{0}', space=sflag, size = 0x4, scoped, tag = 'scoped memory for tpu_custom_call.1']
    #allocation10 [shape = 'u8[65536]{0}', space=vmem, size = 0x10000, scoped, tag = 'input window, operand 5, single buffered']
    #allocation11 [shape = 'u8[65536]{0}', space=vmem, size = 0x10000, scoped, tag = 'input window, operand 7, single buffered']
    #allocation12 [shape = 's32[1]{0}', space=sflag, size = 0x4, scoped, tag = 'scoped memory for tpu_custom_call.1']
    #allocation13 [shape = 'u8[32768]{0}', space=vmem, size = 0x8000, scoped, tag = 'output window, operand 0, single buffered']
    %14 = vsyncpa [#allocation3], 0
    %15 = vsyncpa [#allocation6], 0
    %16 = vsyncpa [#allocation9], 0
    %17 = vsyncpa [#allocation12], 0
    %18 = vsyncpa [#allocation4], 0
    // Predicated region
    $region2: #{tpu_custom_call.1} parent=1 // pred_check
      _
    $region3: #{tpu_custom_call.1} parent=1 // pred_check_branch
      %20 = sbr.rel (0) target = $region5
    $region4: #{tpu_custom_call.1} parent=1 // pred_region
      %22 = vsyncadd [#allocation3], 0
      %s23 = sshll.u32 %s0, 4
      %s24 = int_to_ptr.hbm [resolvable:$true] %s23
      %s25 = sshll.u32 [#allocation2], 4
      %s26 = int_to_ptr.vmem [resolvable:$true] %s25
      %31 = dma.hbm_to_vmem [thread:$0]  %s24, 1024, %s26, [#allocation3], 128, 128, 8
    $region5: #{tpu_custom_call.1} parent=1 // pred_fallthru
      _
    // Predicated region
    $region6: #{tpu_custom_call.1} parent=1 // pred_check
      _
    $region7: #{tpu_custom_call.1} parent=1 // pred_check_branch
      %33 = sbr.rel (0) target = $region9
    $region8: #{tpu_custom_call.1} parent=1 // pred_region
      %35 = vsyncadd [#allocation6], 0
      %s36 = sshll.u32 %s1, 4
      %s37 = int_to_ptr.hbm [resolvable:$true] %s36
      %s38 = sshll.u32 [#allocation5], 4
      %s39 = int_to_ptr.vmem [resolvable:$true] %s38
      %44 = dma.hbm_to_vmem [thread:$0]  %s37, 2048, %s39, [#allocation6], 256, 256, 16
    $region9: #{tpu_custom_call.1} parent=1 // pred_fallthru
      _
    // Predicated region
    $region10: #{tpu_custom_call.1} parent=1 // pred_check
      _
    $region11: #{tpu_custom_call.1} parent=1 // pred_check_branch
      %46 = sbr.rel (0) target = $region13
    $region12: #{tpu_custom_call.1} parent=1 // pred_region
      %48 = vsyncadd [#allocation6], 0
      %s50 = sshll.u32 %s2, 4
      %s51 = int_to_ptr.hbm [resolvable:$true] %s50
      %s52 = sshll.u32 [#allocation7], 4
      %s53 = int_to_ptr.vmem [resolvable:$true] %s52
      %55 = dma.hbm_to_vmem [thread:$0]  %s51, 32, %s53, [#allocation6]
    $region13: #{tpu_custom_call.1} parent=1 // pred_fallthru
      _
    // Predicated region
    $region14: #{tpu_custom_call.1} parent=1 // pred_check
      _
    $region15: #{tpu_custom_call.1} parent=1 // pred_check_branch
      %57 = sbr.rel (0) target = $region17
    $region16: #{tpu_custom_call.1} parent=1 // pred_region
      %59 = vsyncadd [#allocation9], 0
      %s60 = sshll.u32 %s3, 4
      %s61 = int_to_ptr.hbm [resolvable:$true] %s60
      %s62 = sshll.u32 [#allocation8], 4
      %s63 = int_to_ptr.vmem [resolvable:$true] %s62
      %68 = dma.hbm_to_vmem [thread:$0]  %s61, 4096, %s63, [#allocation9], 128, 128, 8
    $region17: #{tpu_custom_call.1} parent=1 // pred_fallthru
      _
    // Predicated region
    $region18: #{tpu_custom_call.1} parent=1 // pred_check
      _
    $region19: #{tpu_custom_call.1} parent=1 // pred_check_branch
      %70 = sbr.rel (0) target = $region21
    $region20: #{tpu_custom_call.1} parent=1 // pred_region
      _
    $region21: #{tpu_custom_call.1} parent=1 // pred_fallthru
      _
    // Predicated region
    $region22: #{tpu_custom_call.1} parent=1 // pred_check
      _
    $region23: #{tpu_custom_call.1} parent=1 // pred_check_branch
      %72 = sbr.rel (0) target = $region25
    $region24: #{tpu_custom_call.1} parent=1 // pred_region
      %74 = vsyncadd [#allocation9], 0
      %s75 = sshll.u32 %s5, 4
      %s76 = int_to_ptr.hbm [resolvable:$true] %s75
      %s77 = sshll.u32 [#allocation10], 4
      %s78 = int_to_ptr.vmem [resolvable:$true] %s77
      %83 = dma.hbm_to_vmem [thread:$0]  %s76, 2048, %s78, [#allocation9], 128, 128, 8
    $region25: #{tpu_custom_call.1} parent=1 // pred_fallthru
      _
    // Predicated region
    $region26: #{tpu_custom_call.1} parent=1 // pred_check
      _
    $region27: #{tpu_custom_call.1} parent=1 // pred_check_branch
      %85 = sbr.rel (0) target = $region29
    $region28: #{tpu_custom_call.1} parent=1 // pred_region
      _
    $region29: #{tpu_custom_call.1} parent=1 // pred_fallthru
      _
    // Predicated region
    $region30: #{tpu_custom_call.1} parent=1 // pred_check
      _
    $region31: #{tpu_custom_call.1} parent=1 // pred_check_branch
      %87 = sbr.rel (0) target = $region33
    $region32: #{tpu_custom_call.1} parent=1 // pred_region
      %89 = vsyncadd [#allocation12], 0
      %s90 = sshll.u32 %s7, 4
      %s91 = int_to_ptr.hbm [resolvable:$true] %s90
      %s92 = sshll.u32 [#allocation11], 4
      %s93 = int_to_ptr.vmem [resolvable:$true] %s92
      %98 = dma.hbm_to_vmem [thread:$0]  %s91, 2048, %s93, [#allocation12], 128, 128, 8
    $region33: #{tpu_custom_call.1} parent=1 // pred_fallthru
      _
    // Predicated region
    $region34: #{tpu_custom_call.1} parent=1 // pred_check
      _
    $region35: #{tpu_custom_call.1} parent=1 // pred_check_branch
      %100 = sbr.rel (0) target = $region37
    $region36: #{tpu_custom_call.1} parent=1 // pred_region
      _
    $region37: #{tpu_custom_call.1} parent=1 // pred_fallthru
      _
    // Predicated region
    $region38: #{tpu_custom_call.1} parent=1 // pred_check
      _
    $region39: #{tpu_custom_call.1} parent=1 // pred_check_branch
      %102 = sbr.rel (0) target = $region41
    $region40: #{tpu_custom_call.1} parent=1 // pred_region
      %104 = dma.done [#allocation3], 1024
    $region41: #{tpu_custom_call.1} parent=1 // pred_fallthru
      _
    // Predicated region
    $region42: #{tpu_custom_call.1} parent=1 // pred_check
      _
    $region43: #{tpu_custom_call.1} parent=1 // pred_check_branch
      %106 = sbr.rel (0) target = $region45
    $region44: #{tpu_custom_call.1} parent=1 // pred_region
      %108 = dma.done [#allocation6], 2048
    $region45: #{tpu_custom_call.1} parent=1 // pred_fallthru
      _
    // Predicated region
    $region46: #{tpu_custom_call.1} parent=1 // pred_check
      _
    $region47: #{tpu_custom_call.1} parent=1 // pred_check_branch
      %110 = sbr.rel (0) target = $region49
    $region48: #{tpu_custom_call.1} parent=1 // pred_region
      %112 = dma.done [#allocation6], 32
    $region49: #{tpu_custom_call.1} parent=1 // pred_fallthru
      _
    // Predicated region
    $region50: #{tpu_custom_call.1} parent=1 // pred_check
      _
    $region51: #{tpu_custom_call.1} parent=1 // pred_check_branch
      %114 = sbr.rel (0) target = $region53
    $region52: #{tpu_custom_call.1} parent=1 // pred_region
      %116 = dma.done [#allocation9], 4096
    $region53: #{tpu_custom_call.1} parent=1 // pred_fallthru
      _
    // Predicated region
    $region54: #{tpu_custom_call.1} parent=1 // pred_check
      _
    $region55: #{tpu_custom_call.1} parent=1 // pred_check_branch
      %118 = sbr.rel (0) target = $region57
    $region56: #{tpu_custom_call.1} parent=1 // pred_region
      %120 = dma.done [#allocation9], 2048
    $region57: #{tpu_custom_call.1} parent=1 // pred_fallthru
      _
    // Predicated region
    $region58: #{tpu_custom_call.1} parent=1 // pred_check
      _
    $region59: #{tpu_custom_call.1} parent=1 // pred_check_branch
      %122 = sbr.rel (0) target = $region61
    $region60: #{tpu_custom_call.1} parent=1 // pred_region
      %124 = dma.done [#allocation12], 2048
    $region61: #{tpu_custom_call.1} parent=1 // pred_fallthru
      _
    %v125 = vld [vmem:[#allocation2] sm:$0xff]
    %v126 = vld [vmem:[#allocation2 + $0x8] sm:$0xff]
    %v127 = vld [vmem:[#allocation2 + $0x10] sm:$0xff]
    %v128 = vld [vmem:[#allocation2 + $0x18] sm:$0xff]
    %v129 = vld [vmem:[#allocation2 + $0x20] sm:$0xff]
    %v130 = vld [vmem:[#allocation2 + $0x28] sm:$0xff]
    %v131 = vld [vmem:[#allocation2 + $0x30] sm:$0xff]
    %v132 = vld [vmem:[#allocation2 + $0x38] sm:$0xff]
    %v133 = vld [vmem:[#allocation5] sm:$0xff]
    %v134 = vld [vmem:[#allocation5 + $0x8] sm:$0xff]
    %v135 = vld [vmem:[#allocation5 + $0x10] sm:$0xff]
    %v136 = vld [vmem:[#allocation5 + $0x18] sm:$0xff]
    %v137 = vld [vmem:[#allocation5 + $0x20] sm:$0xff]
    %v138 = vld [vmem:[#allocation5 + $0x28] sm:$0xff]
    %v139 = vld [vmem:[#allocation5 + $0x30] sm:$0xff]
    %v140 = vld [vmem:[#allocation5 + $0x38] sm:$0xff]
    %v141 = vld [vmem:[#allocation5 + $0x40] sm:$0xff]
    %v142 = vld [vmem:[#allocation5 + $0x48] sm:$0xff]
    %v143 = vld [vmem:[#allocation5 + $0x50] sm:$0xff]
    %v144 = vld [vmem:[#allocation5 + $0x58] sm:$0xff]
    %v145 = vld [vmem:[#allocation5 + $0x60] sm:$0xff]
    %v146 = vld [vmem:[#allocation5 + $0x68] sm:$0xff]
    %v147 = vld [vmem:[#allocation5 + $0x70] sm:$0xff]
    %v148 = vld [vmem:[#allocation5 + $0x78] sm:$0xff]
    %v149 = vld [vmem:[#allocation7] sm:$0x3]
    %v151 = vperm.slane %v149, 0
    %v152 = vperm.slane %v149, 1
    %vm155 = vcmask 523264
    %v157 = vsel %vm155, %v125, 0
    %v160 = vsel %vm155, %v126, 0
    %v163 = vsel %vm155, %v127, 0
    %v166 = vsel %vm155, %v128, 0
    %v169 = vsel %vm155, %v129, 0
    %v172 = vsel %vm155, %v130, 0
    %v175 = vsel %vm155, %v131, 0
    %v178 = vsel %vm155, %v132, 0
    %180 = vmatpush.msra.mxu0 0.0
    %181 = vmatpush.msra.mxu0 0.0
    %182 = vmatpush.msra.mxu0 0.0
    %183 = vmatpush.msra.mxu0 0.0
    %184 = vmatpush.msra.mxu0 0.0
    %185 = vmatpush.msra.mxu0 0.0
    %186 = vmatpush.msra.mxu0 0.0
    %187 = vmatpush.msra.mxu0 0.0
    %188 = vmatpush.msra.mxu0 %v147
    %189 = vmatpush.msra.mxu0 %v145
    %190 = vmatpush.msra.mxu0 %v143
    %191 = vmatpush.msra.mxu0 %v141
    %192 = vmatpush.msra.mxu0 %v139
    %193 = vmatpush.msra.mxu0 %v137
    %194 = vmatpush.msra.mxu0 %v135
    %195 = vmatpush.msra.mxu0 %v133
    %196 = vmatmul.f32.gmra.mxu0 %v157
    %v197 = vpop.f32.mrf.mxu0
    %v198 = vadd.f32 %v151, %v197
    %199 = vmatmul.f32.gmra.mxu0 %v160
    %v200 = vpop.f32.mrf.mxu0
    %v201 = vadd.f32 %v151, %v200
    %202 = vmatmul.f32.gmra.mxu0 %v163
    %v203 = vpop.f32.mrf.mxu0
    %v204 = vadd.f32 %v151, %v203
    %205 = vmatmul.f32.gmra.mxu0 %v166
    %v206 = vpop.f32.mrf.mxu0
    %v207 = vadd.f32 %v151, %v206
    %208 = vmatmul.f32.gmra.mxu0 %v169
    %v209 = vpop.f32.mrf.mxu0
    %v210 = vadd.f32 %v151, %v209
    %211 = vmatmul.f32.gmra.mxu0 %v172
    %v212 = vpop.f32.mrf.mxu0
    %v213 = vadd.f32 %v151, %v212
    %214 = vmatmul.f32.gmra.mxu0 %v175
    %v215 = vpop.f32.mrf.mxu0
    %v216 = vadd.f32 %v151, %v215
    %217 = vmatmul.f32.gmra.mxu0 %v178
    %v218 = vpop.f32.mrf.mxu0
    %v219 = vadd.f32 %v151, %v218
    %220 = vdwg.mxu0
    %221 = vmatpush.msra.mxu0 0.0
    %222 = vmatpush.msra.mxu0 0.0
    %223 = vmatpush.msra.mxu0 0.0
    %224 = vmatpush.msra.mxu0 0.0
    %225 = vmatpush.msra.mxu0 0.0
    %226 = vmatpush.msra.mxu0 0.0
    %227 = vmatpush.msra.mxu0 0.0
    %228 = vmatpush.msra.mxu0 0.0
    %229 = vmatpush.msra.mxu0 %v148
    %230 = vmatpush.msra.mxu0 %v146
    %231 = vmatpush.msra.mxu0 %v144
    %232 = vmatpush.msra.mxu0 %v142
    %233 = vmatpush.msra.mxu0 %v140
    %234 = vmatpush.msra.mxu0 %v138
    %235 = vmatpush.msra.mxu0 %v136
    %236 = vmatpush.msra.mxu0 %v134
    %237 = vmatmul.f32.gmra.mxu0 %v157
    %v238 = vpop.f32.mrf.mxu0
    %v239 = vadd.f32 %v152, %v238
    %240 = vmatmul.f32.gmra.mxu0 %v160
    %v241 = vpop.f32.mrf.mxu0
    %v242 = vadd.f32 %v152, %v241
    %243 = vmatmul.f32.gmra.mxu0 %v163
    %v244 = vpop.f32.mrf.mxu0
    %v245 = vadd.f32 %v152, %v244
    %246 = vmatmul.f32.gmra.mxu0 %v166
    %v247 = vpop.f32.mrf.mxu0
    %v248 = vadd.f32 %v152, %v247
    %249 = vmatmul.f32.gmra.mxu0 %v169
    %v250 = vpop.f32.mrf.mxu0
    %v251 = vadd.f32 %v152, %v250
    %252 = vmatmul.f32.gmra.mxu0 %v172
    %v253 = vpop.f32.mrf.mxu0
    %v254 = vadd.f32 %v152, %v253
    %255 = vmatmul.f32.gmra.mxu0 %v175
    %v256 = vpop.f32.mrf.mxu0
    %v257 = vadd.f32 %v152, %v256
    %258 = vmatmul.f32.gmra.mxu0 %v178
    %v259 = vpop.f32.mrf.mxu0
    %v260 = vadd.f32 %v152, %v259
    %261 = vdwg.mxu0
    %vm262 = vcmp.gt.f32.partialorder %v198, 0.0
    %vm263 = vcmp.gt.f32.partialorder %v239, 0.0
    %vm264 = vcmp.gt.f32.partialorder %v201, 0.0
    %vm265 = vcmp.gt.f32.partialorder %v242, 0.0
    %vm266 = vcmp.gt.f32.partialorder %v204, 0.0
    %vm267 = vcmp.gt.f32.partialorder %v245, 0.0
    %vm268 = vcmp.gt.f32.partialorder %v207, 0.0
    %vm269 = vcmp.gt.f32.partialorder %v248, 0.0
    %vm270 = vcmp.gt.f32.partialorder %v210, 0.0
    %vm271 = vcmp.gt.f32.partialorder %v251, 0.0
    %vm272 = vcmp.gt.f32.partialorder %v213, 0.0
    %vm273 = vcmp.gt.f32.partialorder %v254, 0.0
    %vm274 = vcmp.gt.f32.partialorder %v216, 0.0
    %vm275 = vcmp.gt.f32.partialorder %v257, 0.0
    %vm276 = vcmp.gt.f32.partialorder %v219, 0.0
    %vm277 = vcmp.gt.f32.partialorder %v260, 0.0
    %v278 = vmul.f32 %v198, 0.01
    %v279 = vmul.f32 %v239, 0.01
    %v280 = vmul.f32 %v201, 0.01
    %v281 = vmul.f32 %v242, 0.01
    %v282 = vmul.f32 %v204, 0.01
    %v283 = vmul.f32 %v245, 0.01
    %v284 = vmul.f32 %v207, 0.01
    %v285 = vmul.f32 %v248, 0.01
    %v286 = vmul.f32 %v210, 0.01
    %v287 = vmul.f32 %v251, 0.01
    %v288 = vmul.f32 %v213, 0.01
    %v289 = vmul.f32 %v254, 0.01
    %v290 = vmul.f32 %v216, 0.01
    %v291 = vmul.f32 %v257, 0.01
    %v292 = vmul.f32 %v219, 0.01
    %v293 = vmul.f32 %v260, 0.01
    %v294 = vsel %vm262, %v198, %v278
    %v295 = vsel %vm263, %v239, %v279
    %v296 = vsel %vm264, %v201, %v280
    %v297 = vsel %vm265, %v242, %v281
    %v298 = vsel %vm266, %v204, %v282
    %v299 = vsel %vm267, %v245, %v283
    %v300 = vsel %vm268, %v207, %v284
    %v301 = vsel %vm269, %v248, %v285
    %v302 = vsel %vm270, %v210, %v286
    %v303 = vsel %vm271, %v251, %v287
    %v304 = vsel %vm272, %v213, %v288
    %v305 = vsel %vm273, %v254, %v289
    %v306 = vsel %vm274, %v216, %v290
    %v307 = vsel %vm275, %v257, %v291
    %v308 = vsel %vm276, %v219, %v292
    %v309 = vsel %vm277, %v260, %v293
    %v310 = vld [vmem:[#allocation8] sm:$0xff]
    %v311 = vld [vmem:[#allocation8 + $0x8] sm:$0xff]
    %v312 = vld [vmem:[#allocation8 + $0x10] sm:$0xff]
    %v313 = vld [vmem:[#allocation8 + $0x18] sm:$0xff]
    %v314 = vld [vmem:[#allocation8 + $0x20] sm:$0xff]
    %v315 = vld [vmem:[#allocation8 + $0x28] sm:$0xff]
    %v316 = vld [vmem:[#allocation8 + $0x30] sm:$0xff]
    %v317 = vld [vmem:[#allocation8 + $0x38] sm:$0xff]
    %v318 = vld [vmem:[#allocation8 + $0x40] sm:$0xff]
    %v319 = vld [vmem:[#allocation8 + $0x48] sm:$0xff]
    %v320 = vld [vmem:[#allocation8 + $0x50] sm:$0xff]
    %v321 = vld [vmem:[#allocation8 + $0x58] sm:$0xff]
    %v322 = vld [vmem:[#allocation8 + $0x60] sm:$0xff]
    %v323 = vld [vmem:[#allocation8 + $0x68] sm:$0xff]
    %v324 = vld [vmem:[#allocation8 + $0x70] sm:$0xff]
    %v325 = vld [vmem:[#allocation8 + $0x78] sm:$0xff]
    %v326 = vld [vmem:[#allocation8 + $0x80] sm:$0xff]
    %v327 = vld [vmem:[#allocation8 + $0x88] sm:$0xff]
    %v328 = vld [vmem:[#allocation8 + $0x90] sm:$0xff]
    %v329 = vld [vmem:[#allocation8 + $0x98] sm:$0xff]
    %v330 = vld [vmem:[#allocation8 + $0xa0] sm:$0xff]
    %v331 = vld [vmem:[#allocation8 + $0xa8] sm:$0xff]
    %v332 = vld [vmem:[#allocation8 + $0xb0] sm:$0xff]
    %v333 = vld [vmem:[#allocation8 + $0xb8] sm:$0xff]
    %v334 = vld [vmem:[#allocation8 + $0xc0] sm:$0xff]
    %v335 = vld [vmem:[#allocation8 + $0xc8] sm:$0xff]
    %v336 = vld [vmem:[#allocation8 + $0xd0] sm:$0xff]
    %v337 = vld [vmem:[#allocation8 + $0xd8] sm:$0xff]
    %v338 = vld [vmem:[#allocation8 + $0xe0] sm:$0xff]
    %v339 = vld [vmem:[#allocation8 + $0xe8] sm:$0xff]
    %v340 = vld [vmem:[#allocation8 + $0xf0] sm:$0xff]
    %v341 = vld [vmem:[#allocation8 + $0xf8] sm:$0xff]
    %v342 = vld [vmem:[%s4] sm:$0x1]
    %v344 = vperm.slane %v342, 0
    %346 = vmatpush.msra.mxu0 %v325
    %347 = vmatpush.msra.mxu0 %v324
    %348 = vmatpush.msra.mxu0 %v323
    %349 = vmatpush.msra.mxu0 %v322
    %350 = vmatpush.msra.mxu0 %v321
    %351 = vmatpush.msra.mxu0 %v320
    %352 = vmatpush.msra.mxu0 %v319
    %353 = vmatpush.msra.mxu0 %v318
    %354 = vmatpush.msra.mxu0 %v317
    %355 = vmatpush.msra.mxu0 %v316
    %356 = vmatpush.msra.mxu0 %v315
    %357 = vmatpush.msra.mxu0 %v314
    %358 = vmatpush.msra.mxu0 %v313
    %359 = vmatpush.msra.mxu0 %v312
    %360 = vmatpush.msra.mxu0 %v311
    %361 = vmatpush.msra.mxu0 %v310
    %362 = vmatmul.f32.gmra.mxu0 %v294
    %v363 = vpop.f32.mrf.mxu0
    %v364 = vadd.f32 %v344, %v363
    %365 = vmatmul.f32.gmra.mxu0 %v296
    %v366 = vpop.f32.mrf.mxu0
    %v367 = vadd.f32 %v344, %v366
    %368 = vmatmul.f32.gmra.mxu0 %v298
    %v369 = vpop.f32.mrf.mxu0
    %v370 = vadd.f32 %v344, %v369
    %371 = vmatmul.f32.gmra.mxu0 %v300
    %v372 = vpop.f32.mrf.mxu0
    %v373 = vadd.f32 %v344, %v372
    %374 = vmatmul.f32.gmra.mxu0 %v302
    %v375 = vpop.f32.mrf.mxu0
    %v376 = vadd.f32 %v344, %v375
    %377 = vmatmul.f32.gmra.mxu0 %v304
    %v378 = vpop.f32.mrf.mxu0
    %v379 = vadd.f32 %v344, %v378
    %380 = vmatmul.f32.gmra.mxu0 %v306
    %v381 = vpop.f32.mrf.mxu0
    %v382 = vadd.f32 %v344, %v381
    %383 = vmatmul.f32.gmra.mxu0 %v308
    %v384 = vpop.f32.mrf.mxu0
    %v385 = vadd.f32 %v344, %v384
    %386 = vdwg.mxu0
    %387 = vmatpush.msra.mxu0 %v341
    %388 = vmatpush.msra.mxu0 %v340
    %389 = vmatpush.msra.mxu0 %v339
    %390 = vmatpush.msra.mxu0 %v338
    %391 = vmatpush.msra.mxu0 %v337
    %392 = vmatpush.msra.mxu0 %v336
    %393 = vmatpush.msra.mxu0 %v335
    %394 = vmatpush.msra.mxu0 %v334
    %395 = vmatpush.msra.mxu0 %v333
    %396 = vmatpush.msra.mxu0 %v332
    %397 = vmatpush.msra.mxu0 %v331
    %398 = vmatpush.msra.mxu0 %v330
    %399 = vmatpush.msra.mxu0 %v329
    %400 = vmatpush.msra.mxu0 %v328
    %401 = vmatpush.msra.mxu0 %v327
    %402 = vmatpush.msra.mxu0 %v326
    %403 = vmatmul.f32.gmra.mxu0 %v295
    %v404 = vpop.f32.mrf.mxu0
    %v405 = vadd.f32 %v364, %v404
    %406 = vmatmul.f32.gmra.mxu0 %v297
    %v407 = vpop.f32.mrf.mxu0
    %v408 = vadd.f32 %v367, %v407
    %409 = vmatmul.f32.gmra.mxu0 %v299
    %v410 = vpop.f32.mrf.mxu0
    %v411 = vadd.f32 %v370, %v410
    %412 = vmatmul.f32.gmra.mxu0 %v301
    %v413 = vpop.f32.mrf.mxu0
    %v414 = vadd.f32 %v373, %v413
    %415 = vmatmul.f32.gmra.mxu0 %v303
    %v416 = vpop.f32.mrf.mxu0
    %v417 = vadd.f32 %v376, %v416
    %418 = vmatmul.f32.gmra.mxu0 %v305
    %v419 = vpop.f32.mrf.mxu0
    %v420 = vadd.f32 %v379, %v419
    %421 = vmatmul.f32.gmra.mxu0 %v307
    %v422 = vpop.f32.mrf.mxu0
    %v423 = vadd.f32 %v382, %v422
    %424 = vmatmul.f32.gmra.mxu0 %v309
    %v425 = vpop.f32.mrf.mxu0
    %v426 = vadd.f32 %v385, %v425
    %427 = vdwg.mxu0
    %vm428 = vcmp.gt.f32.partialorder %v405, 0.0
    %vm429 = vcmp.gt.f32.partialorder %v408, 0.0
    %vm430 = vcmp.gt.f32.partialorder %v411, 0.0
    %vm431 = vcmp.gt.f32.partialorder %v414, 0.0
    %vm432 = vcmp.gt.f32.partialorder %v417, 0.0
    %vm433 = vcmp.gt.f32.partialorder %v420, 0.0
    %vm434 = vcmp.gt.f32.partialorder %v423, 0.0
    %vm435 = vcmp.gt.f32.partialorder %v426, 0.0
    %v436 = vmul.f32 %v405, 0.01
    %v437 = vmul.f32 %v408, 0.01
    %v438 = vmul.f32 %v411, 0.01
    %v439 = vmul.f32 %v414, 0.01
    %v440 = vmul.f32 %v417, 0.01
    %v441 = vmul.f32 %v420, 0.01
    %v442 = vmul.f32 %v423, 0.01
    %v443 = vmul.f32 %v426, 0.01
    %v444 = vsel %vm428, %v405, %v436
    %v445 = vsel %vm429, %v408, %v437
    %v446 = vsel %vm430, %v411, %v438
    %v447 = vsel %vm431, %v414, %v439
    %v448 = vsel %vm432, %v417, %v440
    %v449 = vsel %vm433, %v420, %v441
    %v450 = vsel %vm434, %v423, %v442
    %v451 = vsel %vm435, %v426, %v443
    %v452 = vld [vmem:[#allocation10] sm:$0xff]
    %v453 = vld [vmem:[#allocation10 + $0x8] sm:$0xff]
    %v454 = vld [vmem:[#allocation10 + $0x10] sm:$0xff]
    %v455 = vld [vmem:[#allocation10 + $0x18] sm:$0xff]
    %v456 = vld [vmem:[#allocation10 + $0x20] sm:$0xff]
    %v457 = vld [vmem:[#allocation10 + $0x28] sm:$0xff]
    %v458 = vld [vmem:[#allocation10 + $0x30] sm:$0xff]
    %v459 = vld [vmem:[#allocation10 + $0x38] sm:$0xff]
    %v460 = vld [vmem:[#allocation10 + $0x40] sm:$0xff]
    %v461 = vld [vmem:[#allocation10 + $0x48] sm:$0xff]
    %v462 = vld [vmem:[#allocation10 + $0x50] sm:$0xff]
    %v463 = vld [vmem:[#allocation10 + $0x58] sm:$0xff]
    %v464 = vld [vmem:[#allocation10 + $0x60] sm:$0xff]
    %v465 = vld [vmem:[#allocation10 + $0x68] sm:$0xff]
    %v466 = vld [vmem:[#allocation10 + $0x70] sm:$0xff]
    %v467 = vld [vmem:[#allocation10 + $0x78] sm:$0xff]
    %v468 = vld [vmem:[%s6] sm:$0x1]
    %v470 = vperm.slane %v468, 0
    %472 = vmatpush.msra.mxu0 %v467
    %473 = vmatpush.msra.mxu0 %v466
    %474 = vmatpush.msra.mxu0 %v465
    %475 = vmatpush.msra.mxu0 %v464
    %476 = vmatpush.msra.mxu0 %v463
    %477 = vmatpush.msra.mxu0 %v462
    %478 = vmatpush.msra.mxu0 %v461
    %479 = vmatpush.msra.mxu0 %v460
    %480 = vmatpush.msra.mxu0 %v459
    %481 = vmatpush.msra.mxu0 %v458
    %482 = vmatpush.msra.mxu0 %v457
    %483 = vmatpush.msra.mxu0 %v456
    %484 = vmatpush.msra.mxu0 %v455
    %485 = vmatpush.msra.mxu0 %v454
    %486 = vmatpush.msra.mxu0 %v453
    %487 = vmatpush.msra.mxu0 %v452
    %488 = vmatmul.f32.gmra.mxu0 %v444
    %v489 = vpop.f32.mrf.mxu0
    %v490 = vadd.f32 %v470, %v489
    %491 = vmatmul.f32.gmra.mxu0 %v445
    %v492 = vpop.f32.mrf.mxu0
    %v493 = vadd.f32 %v470, %v492
    %494 = vmatmul.f32.gmra.mxu0 %v446
    %v495 = vpop.f32.mrf.mxu0
    %v496 = vadd.f32 %v470, %v495
    %497 = vmatmul.f32.gmra.mxu0 %v447
    %v498 = vpop.f32.mrf.mxu0
    %v499 = vadd.f32 %v470, %v498
    %500 = vmatmul.f32.gmra.mxu0 %v448
    %v501 = vpop.f32.mrf.mxu0
    %v502 = vadd.f32 %v470, %v501
    %503 = vmatmul.f32.gmra.mxu0 %v449
    %v504 = vpop.f32.mrf.mxu0
    %v505 = vadd.f32 %v470, %v504
    %506 = vmatmul.f32.gmra.mxu0 %v450
    %v507 = vpop.f32.mrf.mxu0
    %v508 = vadd.f32 %v470, %v507
    %509 = vmatmul.f32.gmra.mxu0 %v451
    %v510 = vpop.f32.mrf.mxu0
    %v511 = vadd.f32 %v470, %v510
    %512 = vdwg.mxu0
    %vm513 = vcmp.gt.f32.partialorder %v490, 0.0
    %vm514 = vcmp.gt.f32.partialorder %v493, 0.0
    %vm515 = vcmp.gt.f32.partialorder %v496, 0.0
    %vm516 = vcmp.gt.f32.partialorder %v499, 0.0
    %vm517 = vcmp.gt.f32.partialorder %v502, 0.0
    %vm518 = vcmp.gt.f32.partialorder %v505, 0.0
    %vm519 = vcmp.gt.f32.partialorder %v508, 0.0
    %vm520 = vcmp.gt.f32.partialorder %v511, 0.0
    %v521 = vmul.f32 %v490, 0.01
    %v522 = vmul.f32 %v493, 0.01
    %v523 = vmul.f32 %v496, 0.01
    %v524 = vmul.f32 %v499, 0.01
    %v525 = vmul.f32 %v502, 0.01
    %v526 = vmul.f32 %v505, 0.01
    %v527 = vmul.f32 %v508, 0.01
    %v528 = vmul.f32 %v511, 0.01
    %v529 = vsel %vm513, %v490, %v521
    %v530 = vsel %vm514, %v493, %v522
    %v531 = vsel %vm515, %v496, %v523
    %v532 = vsel %vm516, %v499, %v524
    %v533 = vsel %vm517, %v502, %v525
    %v534 = vsel %vm518, %v505, %v526
    %v535 = vsel %vm519, %v508, %v527
    %v536 = vsel %vm520, %v511, %v528
    %v537 = vld [vmem:[#allocation11] sm:$0xff]
    %v538 = vld [vmem:[#allocation11 + $0x8] sm:$0xff]
    %v539 = vld [vmem:[#allocation11 + $0x10] sm:$0xff]
    %v540 = vld [vmem:[#allocation11 + $0x18] sm:$0xff]
    %v541 = vld [vmem:[#allocation11 + $0x20] sm:$0xff]
    %v542 = vld [vmem:[#allocation11 + $0x28] sm:$0xff]
    %v543 = vld [vmem:[#allocation11 + $0x30] sm:$0xff]
    %v544 = vld [vmem:[#allocation11 + $0x38] sm:$0xff]
    %v545 = vld [vmem:[#allocation11 + $0x40] sm:$0xff]
    %v546 = vld [vmem:[#allocation11 + $0x48] sm:$0xff]
    %v547 = vld [vmem:[#allocation11 + $0x50] sm:$0xff]
    %v548 = vld [vmem:[#allocation11 + $0x58] sm:$0xff]
    %v549 = vld [vmem:[#allocation11 + $0x60] sm:$0xff]
    %v550 = vld [vmem:[#allocation11 + $0x68] sm:$0xff]
    %v551 = vld [vmem:[#allocation11 + $0x70] sm:$0xff]
    %v552 = vld [vmem:[#allocation11 + $0x78] sm:$0xff]
    %v553 = vld [vmem:[%s8] sm:$0x1]
    %v555 = vperm.slane %v553, 0
    %557 = vmatpush.msra.mxu0 %v552
    %558 = vmatpush.msra.mxu0 %v551
    %559 = vmatpush.msra.mxu0 %v550
    %560 = vmatpush.msra.mxu0 %v549
    %561 = vmatpush.msra.mxu0 %v548
    %562 = vmatpush.msra.mxu0 %v547
    %563 = vmatpush.msra.mxu0 %v546
    %564 = vmatpush.msra.mxu0 %v545
    %565 = vmatpush.msra.mxu0 %v544
    %566 = vmatpush.msra.mxu0 %v543
    %567 = vmatpush.msra.mxu0 %v542
    %568 = vmatpush.msra.mxu0 %v541
    %569 = vmatpush.msra.mxu0 %v540
    %570 = vmatpush.msra.mxu0 %v539
    %571 = vmatpush.msra.mxu0 %v538
    %572 = vmatpush.msra.mxu0 %v537
    %573 = vmatmul.f32.gmra.mxu0 %v529
    %v574 = vpop.f32.mrf.mxu0
    %v575 = vadd.f32 %v555, %v574
    %576 = vmatmul.f32.gmra.mxu0 %v530
    %v577 = vpop.f32.mrf.mxu0
    %v578 = vadd.f32 %v555, %v577
    %579 = vmatmul.f32.gmra.mxu0 %v531
    %v580 = vpop.f32.mrf.mxu0
    %v581 = vadd.f32 %v555, %v580
    %582 = vmatmul.f32.gmra.mxu0 %v532
    %v583 = vpop.f32.mrf.mxu0
    %v584 = vadd.f32 %v555, %v583
    %585 = vmatmul.f32.gmra.mxu0 %v533
    %v586 = vpop.f32.mrf.mxu0
    %v587 = vadd.f32 %v555, %v586
    %588 = vmatmul.f32.gmra.mxu0 %v534
    %v589 = vpop.f32.mrf.mxu0
    %v590 = vadd.f32 %v555, %v589
    %591 = vmatmul.f32.gmra.mxu0 %v535
    %v592 = vpop.f32.mrf.mxu0
    %v593 = vadd.f32 %v555, %v592
    %594 = vmatmul.f32.gmra.mxu0 %v536
    %v595 = vpop.f32.mrf.mxu0
    %v596 = vadd.f32 %v555, %v595
    %597 = vdwg.mxu0
    %v598 = vtanh.pop %v575
    %v599 = vtanh.pop %v578
    %v600 = vtanh.pop %v581
    %v601 = vtanh.pop %v584
    %v602 = vtanh.pop %v587
    %v603 = vtanh.pop %v590
    %v604 = vtanh.pop %v593
    %v605 = vtanh.pop %v596
    %606 = vst [vmem:[#allocation13] sm:$0xff] %v598
    %607 = vst [vmem:[#allocation13 + $0x8] sm:$0xff] %v599
    %608 = vst [vmem:[#allocation13 + $0x10] sm:$0xff] %v600
    %609 = vst [vmem:[#allocation13 + $0x18] sm:$0xff] %v601
    %610 = vst [vmem:[#allocation13 + $0x20] sm:$0xff] %v602
    %611 = vst [vmem:[#allocation13 + $0x28] sm:$0xff] %v603
    %612 = vst [vmem:[#allocation13 + $0x30] sm:$0xff] %v604
    %613 = vst [vmem:[#allocation13 + $0x38] sm:$0xff] %v605
    // Predicated region
    $region62: #{tpu_custom_call.1} parent=1 // pred_check
      _
    $region63: #{tpu_custom_call.1} parent=1 // pred_check_branch
      %615 = sbr.rel (0) target = $region65
    $region64: #{tpu_custom_call.1} parent=1 // pred_region
      %617 = vsyncadd [#allocation4], 0
      %s618 = sshll.u32 [#allocation13], 4
      %s619 = int_to_ptr.vmem [resolvable:$true] %s618
      %s620 = sshll.u32 %s9, 4
      %s621 = int_to_ptr.hbm [resolvable:$true] %s620
      %626 = dma.vmem_to_hbm [thread:$0]  %s619, 1024, %s621, [#allocation4], 128, 128, 8
    $region65: #{tpu_custom_call.1} parent=1 // pred_fallthru
      _
    // Predicated region
    $region66: #{tpu_custom_call.1} parent=1 // pred_check
      _
    $region67: #{tpu_custom_call.1} parent=1 // pred_check_branch
      %628 = sbr.rel (0) target = $region69
    $region68: #{tpu_custom_call.1} parent=1 // pred_region
      %630 = dma.done [#allocation4], 1024
    $region69: #{tpu_custom_call.1} parent=1 // pred_fallthru
      _
    %631 = vsyncpa [#allocation3], 1
    %632 = vsyncpa [#allocation6], 1
    %633 = vsyncpa [#allocation9], 1
    %634 = vsyncpa [#allocation12], 1
    %635 = vsyncpa [#allocation4], 1

</llo_original>
